<compile_context>
chip_gen: v6e
topology: v6e:2x2x1
jax: 0.10.0
libtpu: 0.0.40
codegen_flags: <defaults>
</compile_context>

<pallas_src>
import functools

import jax
import jax.numpy as jnp
from jax.experimental import pallas as pl
from jax.experimental.pallas import tpu as pltpu


def _rmsnorm_kernel(x_ref, w_ref, o_ref, *, eps):
    # x_ref: (tm, D) tile, w_ref: (1, D) weight (VMEM-resident), o_ref: (tm, D)
    x = x_ref[...].astype(jnp.float32)                     # x.float()
    ms = jnp.mean(x * x, axis=-1, keepdims=True)           # mean of squares over hidden
    inv = jax.lax.rsqrt(ms + eps)                          # rsqrt(ms + eps)  (EUP)
    # Match PyTorch semantics exactly: _norm(x.float()).type_as(x) * weight
    normed = (x * inv).astype(x_ref.dtype)                 # .type_as(x)
    o_ref[...] = (normed.astype(jnp.float32)
                  * w_ref[...].astype(jnp.float32)).astype(o_ref.dtype)


def _pick_row_tile(rows, D, dtype):
    """Largest row tile that keeps in+out double-buffering + f32 temps in VMEM."""
    itemsize = jnp.dtype(dtype).itemsize
    # sublane packing: 8 rows/vreg for 32-bit dtypes, 16 for 16-bit (bf16/f16)
    pack = 16 if itemsize == 2 else 8
    # ~6 MiB per input tile; with in+out double-buffering (4 tile copies) plus
    # f32 compute temporaries this stays inside a 48 MiB scoped VMEM budget —
    # safe on v7x's 64 MiB physical VMEM and comfortably under v5e/v6e's 128 MiB.
    tile_bytes_cap = 6 * 1024 * 1024
    max_rows = max(pack, tile_bytes_cap // max(1, D * itemsize))
    tile = min(rows, max_rows, 1024)
    tile = max(pack, (tile // pack) * pack)
    return tile


def rmsnorm(x, weight, eps=1e-6, row_tile=None):
    """RMSNorm over the last axis of x, elementwise scale by `weight`.

    x: (..., D) float array; weight: (D,).
    """
    D = x.shape[-1]
    assert weight.shape == (D,)
    orig_shape = x.shape
    x2d = x.reshape(-1, D)          # contiguous view; no extra HBM copy
    rows = x2d.shape[0]

    if row_tile is None:
        row_tile = _pick_row_tile(rows, D, x.dtype)

    grid = (pl.cdiv(rows, row_tile),)          # partial last block handled by masking
    w2d = weight.reshape(1, D)                 # keep natural dtype; cast once in-kernel

    kernel = functools.partial(_rmsnorm_kernel, eps=eps)

    out = pl.pallas_call(
        kernel,
        out_shape=jax.ShapeDtypeStruct((rows, D), x.dtype),
        grid_spec=pltpu.PrefetchScalarGridSpec(
            num_scalar_prefetch=0,
            grid=grid,
            in_specs=[
                # x tile: full hidden dim per block (never split the reduction axis)
                pl.BlockSpec((row_tile, D), lambda i: (i, 0)),
                # weight: constant index_map -> stays resident in VMEM, no per-step DMA
                pl.BlockSpec((1, D), lambda i: (0, 0)),
            ],
            out_specs=pl.BlockSpec((row_tile, D), lambda i: (i, 0)),
        ),
        compiler_params=pltpu.CompilerParams(
            # parallel row axis -> megacore sharding on v7x (neutral on v5e/v6e)
            dimension_semantics=("parallel",),
            # raise v5e's 16 MiB default scoped limit; still safe on v7x (64 MiB physical)
            vmem_limit_bytes=48 * 1024 * 1024,
        ),
    )(x2d, w2d)

    return out.reshape(orig_shape)


if __name__ == "__main__":
    key = jax.random.PRNGKey(0)
    B, S, D = 2, 8, 32
    x = jax.random.normal(key, (B, S, D), dtype=jnp.float32)

    # Deterministic parameter init, same as torch.nn.Parameter(torch.ones(dim))
    weight = jnp.ones((D,), dtype=jnp.float32)
    eps = 1e-6

    out = rmsnorm(x, weight, eps=eps)
    out = jax.block_until_ready(out)

    # Pure-JAX reference mirroring the PyTorch module's cast order.
    xf = x.astype(jnp.float32)
    normed_ref = (xf * jax.lax.rsqrt(jnp.mean(xf * xf, axis=-1, keepdims=True) + eps)
                  ).astype(x.dtype)
    ref = (normed_ref.astype(jnp.float32) * weight).astype(x.dtype)
    assert jnp.allclose(out, ref, atol=1e-5, rtol=1e-5), "mismatch vs reference"

    print("KERNEL_OK")
</pallas_src>

<mosaic_0001>
module attributes {stable_mosaic.version = 11 : i64} {
  func.func @_rmsnorm_kernel(%arg0: i32, %arg1: memref<16x32xf32, #tpu.memory_space<vmem>>, %arg2: memref<1x32xf32, #tpu.memory_space<vmem>>, %arg3: memref<16x32xf32, #tpu.memory_space<vmem>>) attributes {dimension_semantics = [#tpu.dimension_semantics<parallel>], iteration_bounds = array<i64: 1>, scalar_prefetch = 0 : i64, scratch_operands = 0 : i64, tpu.core_type = #tpu.core_type<tc>, window_params = [{transform_indices = @transform_0, window_bounds = array<i64: 16, 32>}, {pipeline_mode = #tpu.pipeline_mode<synchronous>, transform_indices = @transform_1, window_bounds = array<i64: 1, 32>}, {transform_indices = @transform_2, window_bounds = array<i64: 16, 32>}]} {
    %c0 = arith.constant 0 : index
    %c0_0 = arith.constant 0 : index
    %0 = vector.load %arg1[%c0, %c0_0] : memref<16x32xf32, #tpu.memory_space<vmem>>, vector<16x32xf32>
    %1 = arith.mulf %0, %0 : vector<16x32xf32>
    %cst = arith.constant dense<0.000000e+00> : vector<16xf32>
    %2 = vector.multi_reduction <add>, %1, %cst [1] : vector<16x32xf32> to vector<16xf32>
    %3 = vector.shape_cast %2 : vector<16xf32> to vector<16x1xf32>
    %cst_1 = arith.constant 3.200000e+01 : f32
    %4 = vector.broadcast %cst_1 : f32 to vector<16x1xf32>
    %5 = arith.divf %3, %4 : vector<16x1xf32>
    %cst_2 = arith.constant 9.99999997E-7 : f32
    %6 = vector.broadcast %cst_2 : f32 to vector<16x1xf32>
    %7 = arith.addf %5, %6 : vector<16x1xf32>
    %8 = math.rsqrt %7 : vector<16x1xf32>
    %9 = vector.broadcast %8 : vector<16x1xf32> to vector<16x32xf32>
    %10 = arith.mulf %0, %9 : vector<16x32xf32>
    %c0_3 = arith.constant 0 : index
    %c0_4 = arith.constant 0 : index
    %11 = vector.load %arg2[%c0_3, %c0_4] : memref<1x32xf32, #tpu.memory_space<vmem>>, vector<1x32xf32>
    %12 = vector.broadcast %11 : vector<1x32xf32> to vector<16x32xf32>
    %13 = arith.mulf %10, %12 : vector<16x32xf32>
    %c0_5 = arith.constant 0 : index
    %c0_6 = arith.constant 0 : index
    %14 = vector.load %arg3[%c0_5, %c0_6] : memref<16x32xf32, #tpu.memory_space<vmem>>, vector<16x32xf32>
    tpu.vector_store %arg3[%c0_5, %c0_6], %13 {strides = array<i32>} : memref<16x32xf32, #tpu.memory_space<vmem>>, vector<16x32xf32>,
    return
  }
  func.func @transform_0(%arg0: i32) -> (i32, i32) {
    %c0_i32 = arith.constant 0 : i32
    %c0_i32_0 = arith.constant 0 : i32
    return %arg0, %c0_i32 : i32, i32
  }
  func.func @transform_1(%arg0: i32) -> (i32, i32) {
    %c0_i32 = arith.constant 0 : i32
    %c0_i32_0 = arith.constant 0 : i32
    %c0_i32_1 = arith.constant 0 : i32
    return %c0_i32, %c0_i32_0 : i32, i32
  }
  func.func @transform_2(%arg0: i32) -> (i32, i32) {
    %c0_i32 = arith.constant 0 : i32
    %c0_i32_0 = arith.constant 0 : i32
    return %arg0, %c0_i32 : i32, i32
  }
}

</mosaic_0001>

<llo_original>
// kernel: tpu_custom_call.1
$region0: #{tpu_custom_call.1}
  #allocation0 [shape = 'u32[]', space=smem, size = 0x4, offset = 0x4, fixed_abs, tag = 'smem constant byte address 0x4 - core index']
  #allocation1 [shape = 'u32[144,128]{1,0:T(1,128)}', space=vmem, size = 0x12000, scoped, tag = 'internal scratch']
  %s0 = inlined_call_operand.hbm [shape: f32[16,32], index: 0, kind: input, shape index: {}]
  %s1 = inlined_call_operand.vmem [shape: f32[1,32], index: 1, kind: input, shape index: {}]
  %s2 = inlined_call_operand.hbm [shape: f32[16,32], index: 2, kind: output, shape index: {}]
  %s3 = sld [smem:[#allocation0]]
  $region22: #{tpu_custom_call.1} parent=0
    _
  %s5 = ssub.s32 1, %s3
  %s6 = scalar_select 0, %s5, %s3
  $region1: #{tpu_custom_call.1} parent=0
    #allocation2 [shape = 'u8[8192]{0}', space=vmem, size = 0x2000, scoped, tag = 'input window, operand 0, single buffered']
    #allocation3 [shape = 's32[1]{0}', space=sflag, size = 0x4, scoped, tag = 'scoped memory for tpu_custom_call.1']
    #allocation4 [shape = 's32[1]{0}', space=sflag, size = 0x4, scoped, tag = 'scoped memory for tpu_custom_call.1']
    #allocation5 [shape = 'u8[8192]{0}', space=vmem, size = 0x2000, scoped, tag = 'output window, operand 0, single buffered']
    %7 = vsyncpa [#allocation3], 0
    %8 = vsyncpa [#allocation4], 0
    // Predicated region
    $region2: #{tpu_custom_call.1} parent=1 // pred_check
      _
    $region3: #{tpu_custom_call.1} parent=1 // pred_check_branch
      %10 = sbr.rel (0) target = $region5
    $region4: #{tpu_custom_call.1} parent=1 // pred_region
      %s12 = ssub.s32 256, 256
      %13 = vsyncadd [#allocation3], %s12
      %s14 = sshll.u32 [#allocation2], 4
      %s15 = int_to_ptr.vmem [resolvable:$true] %s14
      %20 = dma.hbm_to_vmem [thread:$0]  %s0, 256, %s15, [#allocation3], 128, 128, 8
    $region5: #{tpu_custom_call.1} parent=1 // pred_fallthru
      _
    // Predicated region
    $region6: #{tpu_custom_call.1} parent=1 // pred_check
      _
    $region7: #{tpu_custom_call.1} parent=1 // pred_check_branch
      %22 = sbr.rel (0) target = $region9
    $region8: #{tpu_custom_call.1} parent=1 // pred_region
      _
    $region9: #{tpu_custom_call.1} parent=1 // pred_fallthru
      _
    // Predicated region
    $region10: #{tpu_custom_call.1} parent=1 // pred_check
      _
    $region11: #{tpu_custom_call.1} parent=1 // pred_check_branch
      %24 = sbr.rel (0) target = $region13
    $region12: #{tpu_custom_call.1} parent=1 // pred_region
      %25 = dma.done [#allocation3], 256
    $region13: #{tpu_custom_call.1} parent=1 // pred_fallthru
      _
    %v26 = vld [vmem:[#allocation2] sm:$0xff]
    %v27 = vld [vmem:[#allocation2 + $0x8] sm:$0xff]
    %v28 = vmul.f32 %v26, %v26
    %v29 = vmul.f32 %v27, %v27
    %vm30 = vcmask 261120
    %v31 = vsel %vm30, %v28, 0.0
    %32 = vadd.xlane.f32.xlu0 %v31
    %v33 = vpop.xlane.xlu0 %32
    %v34 = vsel %vm30, %v29, 0.0
    %35 = vadd.xlane.f32.xlu0 %v34
    %v36 = vpop.xlane.xlu0 %35
    %v37 = vrcp.pop 32.0
    %v38 = vmul.f32 %v33, %v37
    %v39 = vmul.f32 %v36, %v37
    %v40 = vadd.f32 %v38, 1e-06
    %v41 = vadd.f32 %v39, 1e-06
    %v42 = vrsqrt.pop %v40
    %v43 = vrsqrt.pop %v41
    %v44 = vmul.f32 %v26, %v42
    %v45 = vmul.f32 %v27, %v43
    %v46 = vld [vmem:[%s1] sm:$0x1]
    %v48 = vlaneseq
    %v49 = vshrl.u32 %v48, 7
    %v50 = vsub.s32 0, %v49
    %v51 = vrot.slane %v46, %v50
    %v53 = vmul.f32 %v44, %v51
    %v54 = vmul.f32 %v45, %v51
    %55 = vst.msk [vmem:[#allocation5] sm:$0xff] %vm30, %v53
    %56 = vst.msk [vmem:[#allocation5 + $0x8] sm:$0xff] %vm30, %v54
    // Predicated region
    $region14: #{tpu_custom_call.1} parent=1 // pred_check
      _
    $region15: #{tpu_custom_call.1} parent=1 // pred_check_branch
      %58 = sbr.rel (0) target = $region17
    $region16: #{tpu_custom_call.1} parent=1 // pred_region
      %s60 = ssub.s32 256, 256
      %61 = vsyncadd [#allocation4], %s60
      %s62 = sshll.u32 [#allocation5], 4
      %s63 = int_to_ptr.vmem [resolvable:$true] %s62
      %68 = dma.vmem_to_hbm [thread:$0]  %s63, 256, %s2, [#allocation4], 128, 128, 8
    $region17: #{tpu_custom_call.1} parent=1 // pred_fallthru
      _
    // Predicated region
    $region18: #{tpu_custom_call.1} parent=1 // pred_check
      _
    $region19: #{tpu_custom_call.1} parent=1 // pred_check_branch
      %70 = sbr.rel (0) target = $region21
    $region20: #{tpu_custom_call.1} parent=1 // pred_region
      %71 = dma.done [#allocation4], 256
    $region21: #{tpu_custom_call.1} parent=1 // pred_fallthru
      _
    %72 = vsyncpa [#allocation3], 1
    %73 = vsyncpa [#allocation4], 1

</llo_original>
